<compile_context>
chip_gen: v7x
topology: tpu7x:2x2x1
jax: 0.10.0
libtpu: 0.0.40
codegen_flags: <defaults>
</compile_context>

<pallas_src>
import functools

import jax
import jax.numpy as jnp
from jax.experimental import pallas as pl
from jax.experimental.pallas import tpu as pltpu


# ----------------------------------------------------------------------------
# Generic fused Residual kernel:  out_tile = fn(x_tile, *params) + x_tile
# ----------------------------------------------------------------------------
def _residual_kernel(*refs, fn, n_params):
    x_ref = refs[0]
    param_refs = refs[1:1 + n_params]
    o_ref = refs[1 + n_params]

    x = x_ref[...]                                    # (rows, D) f32, in VMEM
    y = fn(x, *(p[...] for p in param_refs))          # inner fn, f32 result
    o_ref[...] = (y + x).astype(o_ref.dtype)          # fused residual add


def pallas_residual(fn, x, params, *, block_rows=128):
    """Residual(fn)(x) = fn(x) + x, fused into a single Pallas kernel.

    x:       (R, D) float32, D a multiple of 128 (lane-dense), R % block_rows == 0.
    params:  tuple of small weight/bias arrays, kept VMEM-resident across steps.
    """
    R, D = x.shape
    assert D % 128 == 0, "keep the feature dim lane-dense (multiple of 128)"
    assert R % block_rows == 0 and block_rows % 8 == 0

    grid = (R // block_rows,)

    in_specs = [pl.BlockSpec((block_rows, D), lambda i: (i, 0))]
    for p in params:
        # constant index_map -> weight/bias block re-used every grid step
        in_specs.append(pl.BlockSpec(p.shape, lambda i, _n=p.ndim: (0,) * _n))

    kernel = functools.partial(_residual_kernel, fn=fn, n_params=len(params))
    return pl.pallas_call(
        kernel,
        out_shape=jax.ShapeDtypeStruct((R, D), x.dtype),
        grid=grid,
        in_specs=in_specs,
        out_specs=pl.BlockSpec((block_rows, D), lambda i: (i, 0)),
        compiler_params=pltpu.CompilerParams(
            dimension_semantics=("parallel",)),
    )(x, *params)


# ----------------------------------------------------------------------------
# Representative inner fn (what a Residual typically wraps in the unet):
# channel-mixing Linear -> SiLU -> Linear.  bf16 MXU operands, f32 accum,
# f32 elementwise math (v5e-safe).
# ----------------------------------------------------------------------------
def mlp_block(x, w1, b1, w2, b2):
    h = jnp.dot(x.astype(jnp.bfloat16), w1,
                preferred_element_type=jnp.float32) + b1
    h = h * jax.nn.sigmoid(h)                         # SiLU in f32
    y = jnp.dot(h.astype(jnp.bfloat16), w2,
                preferred_element_type=jnp.float32) + b2
    return y


# ----------------------------------------------------------------------------
# Pure-JAX reference: Residual(fn)(x) = fn(x) + x  (same bf16 matmul path)
# ----------------------------------------------------------------------------
def ref_residual(fn, x, params):
    return fn(x, *params) + x


# ----------------------------------------------------------------------------
if __name__ == "__main__":
    B, S, D = 2, 256, 128          # Residual is shape-agnostic; D=128 -> lane-dense
    key = jax.random.PRNGKey(0)
    kx, k1, k2, k3, k4 = jax.random.split(key, 5)

    x = jax.random.normal(kx, (B, S, D), jnp.float32)
    w1 = (jax.random.normal(k1, (D, D), jnp.float32) / jnp.sqrt(D)).astype(jnp.bfloat16)
    b1 = 0.01 * jax.random.normal(k2, (1, D), jnp.float32)
    w2 = (jax.random.normal(k3, (D, D), jnp.float32) / jnp.sqrt(D)).astype(jnp.bfloat16)
    b2 = 0.01 * jax.random.normal(k4, (1, D), jnp.float32)
    params = (w1, b1, w2, b2)

    def pallas_fwd(x3, params):
        R = x3.shape[0] * x3.shape[1]
        y = pallas_residual(mlp_block, x3.reshape(R, D), params, block_rows=128)
        return y.reshape(x3.shape)

    pallas_jit = jax.jit(pallas_fwd)
    ref_jit = jax.jit(functools.partial(ref_residual, mlp_block))

    out = jax.block_until_ready(pallas_jit(x, params))
    ref = jax.block_until_ready(ref_jit(x.reshape(B * S, D), params)).reshape(B, S, D)

    assert out.shape == (B, S, D), out.shape
    max_err = float(jnp.max(jnp.abs(out - ref)))
    assert jnp.allclose(out, ref, rtol=1e-3, atol=1e-3), max_err

    print("KERNEL_OK")
</pallas_src>

<mosaic_0001>
module attributes {stable_mosaic.version = 11 : i64} {
  func.func @_residual_kernel(%arg0: i32, %arg1: memref<128x128xf32, #tpu.memory_space<vmem>>, %arg2: memref<128x128xbf16, #tpu.memory_space<vmem>>, %arg3: memref<1x128xf32, #tpu.memory_space<vmem>>, %arg4: memref<128x128xbf16, #tpu.memory_space<vmem>>, %arg5: memref<1x128xf32, #tpu.memory_space<vmem>>, %arg6: memref<128x128xf32, #tpu.memory_space<vmem>>) attributes {dimension_semantics = [#tpu.dimension_semantics<parallel>], iteration_bounds = array<i64: 4>, scalar_prefetch = 0 : i64, scratch_operands = 0 : i64, tpu.core_type = #tpu.core_type<tc>, window_params = [{transform_indices = @transform_0, window_bounds = array<i64: 128, 128>}, {pipeline_mode = #tpu.pipeline_mode<synchronous>, transform_indices = @transform_1, window_bounds = array<i64: 128, 128>}, {pipeline_mode = #tpu.pipeline_mode<synchronous>, transform_indices = @transform_2, window_bounds = array<i64: 1, 128>}, {pipeline_mode = #tpu.pipeline_mode<synchronous>, transform_indices = @transform_3, window_bounds = array<i64: 128, 128>}, {pipeline_mode = #tpu.pipeline_mode<synchronous>, transform_indices = @transform_4, window_bounds = array<i64: 1, 128>}, {transform_indices = @transform_5, window_bounds = array<i64: 128, 128>}]} {
    %c0 = arith.constant 0 : index
    %c0_0 = arith.constant 0 : index
    %0 = vector.load %arg1[%c0, %c0_0] : memref<128x128xf32, #tpu.memory_space<vmem>>, vector<128x128xf32>
    %c0_1 = arith.constant 0 : index
    %c0_2 = arith.constant 0 : index
    %1 = vector.load %arg2[%c0_1, %c0_2] : memref<128x128xbf16, #tpu.memory_space<vmem>>, vector<128x128xbf16>
    %c0_3 = arith.constant 0 : index
    %c0_4 = arith.constant 0 : index
    %2 = vector.load %arg3[%c0_3, %c0_4] : memref<1x128xf32, #tpu.memory_space<vmem>>, vector<1x128xf32>
    %c0_5 = arith.constant 0 : index
    %c0_6 = arith.constant 0 : index
    %3 = vector.load %arg4[%c0_5, %c0_6] : memref<128x128xbf16, #tpu.memory_space<vmem>>, vector<128x128xbf16>
    %c0_7 = arith.constant 0 : index
    %c0_8 = arith.constant 0 : index
    %4 = vector.load %arg5[%c0_7, %c0_8] : memref<1x128xf32, #tpu.memory_space<vmem>>, vector<1x128xf32>
    %5 = arith.truncf %0 : vector<128x128xf32> to vector<128x128xbf16>
    %cst = arith.constant dense<0.000000e+00> : vector<128x128xf32>
    %6 = tpu.matmul %5, %1, %cst {dimension_numbers = #tpu.dot_dimension_numbers<[1], [0], [0], [1], [0, 0, 1, 1], [], []>} : vector<128x128xbf16>, vector<128x128xbf16>, vector<128x128xf32> -> vector<128x128xf32>
    %7 = vector.broadcast %2 : vector<1x128xf32> to vector<128x128xf32>
    %8 = arith.addf %6, %7 : vector<128x128xf32>
    %9 = arith.negf %8 : vector<128x128xf32>
    %10 = math.exp %9 : vector<128x128xf32>
    %cst_9 = arith.constant 1.000000e+00 : f32
    %11 = vector.broadcast %cst_9 : f32 to vector<128x128xf32>
    %12 = arith.addf %11, %10 : vector<128x128xf32>
    %13 = arith.divf %11, %12 : vector<128x128xf32>
    %14 = arith.mulf %8, %13 : vector<128x128xf32>
    %15 = arith.truncf %14 : vector<128x128xf32> to vector<128x128xbf16>
    %cst_10 = arith.constant dense<0.000000e+00> : vector<128x128xf32>
    %16 = tpu.matmul %15, %3, %cst_10 {dimension_numbers = #tpu.dot_dimension_numbers<[1], [0], [0], [1], [0, 0, 1, 1], [], []>} : vector<128x128xbf16>, vector<128x128xbf16>, vector<128x128xf32> -> vector<128x128xf32>
    %17 = vector.broadcast %4 : vector<1x128xf32> to vector<128x128xf32>
    %18 = arith.addf %16, %17 : vector<128x128xf32>
    %19 = arith.addf %18, %0 : vector<128x128xf32>
    %c0_11 = arith.constant 0 : index
    %c0_12 = arith.constant 0 : index
    %20 = vector.load %arg6[%c0_11, %c0_12] : memref<128x128xf32, #tpu.memory_space<vmem>>, vector<128x128xf32>
    tpu.vector_store %arg6[%c0_11, %c0_12], %19 {strides = array<i32>} : memref<128x128xf32, #tpu.memory_space<vmem>>, vector<128x128xf32>,
    return
  }
  func.func @transform_0(%arg0: i32) -> (i32, i32) {
    %c0_i32 = arith.constant 0 : i32
    %c0_i32_0 = arith.constant 0 : i32
    return %arg0, %c0_i32 : i32, i32
  }
  func.func @transform_1(%arg0: i32) -> (i32, i32) {
    %c0_i32 = arith.constant 0 : i32
    %c0_i32_0 = arith.constant 0 : i32
    %c0_i32_1 = arith.constant 0 : i32
    return %c0_i32, %c0_i32_0 : i32, i32
  }
  func.func @transform_2(%arg0: i32) -> (i32, i32) {
    %c0_i32 = arith.constant 0 : i32
    %c0_i32_0 = arith.constant 0 : i32
    %c0_i32_1 = arith.constant 0 : i32
    return %c0_i32, %c0_i32_0 : i32, i32
  }
  func.func @transform_3(%arg0: i32) -> (i32, i32) {
    %c0_i32 = arith.constant 0 : i32
    %c0_i32_0 = arith.constant 0 : i32
    %c0_i32_1 = arith.constant 0 : i32
    return %c0_i32, %c0_i32_0 : i32, i32
  }
  func.func @transform_4(%arg0: i32) -> (i32, i32) {
    %c0_i32 = arith.constant 0 : i32
    %c0_i32_0 = arith.constant 0 : i32
    %c0_i32_1 = arith.constant 0 : i32
    return %c0_i32, %c0_i32_0 : i32, i32
  }
  func.func @transform_5(%arg0: i32) -> (i32, i32) {
    %c0_i32 = arith.constant 0 : i32
    %c0_i32_0 = arith.constant 0 : i32
    return %arg0, %c0_i32 : i32, i32
  }
}

</mosaic_0001>

<llo_original>
// kernel: pallas_fwd.1
$region0: #{pallas_fwd.1}
  #allocation0 [shape = 'u32[]', space=smem, size = 0x4, offset = 0x4, fixed_abs, tag = 'smem constant byte address 0x4 - core index']
  #allocation1 [shape = 'u32[144,128]{1,0:T(1,128)}', space=vmem, size = 0x12000, scoped, tag = 'internal scratch']
  %s0 = inlined_call_operand.hbm [shape: f32[512,128], index: 0, kind: input, shape index: {}]
  %s1 = inlined_call_operand.hbm [shape: bf16[128,128], index: 1, kind: input, shape index: {}]
  %s2 = inlined_call_operand.vmem [shape: f32[1,128], index: 2, kind: input, shape index: {}]
  %s3 = inlined_call_operand.hbm [shape: bf16[128,128], index: 3, kind: input, shape index: {}]
  %s4 = inlined_call_operand.vmem [shape: f32[1,128], index: 4, kind: input, shape index: {}]
  %s5 = inlined_call_operand.hbm [shape: f32[512,128], index: 5, kind: output, shape index: {}]
  %s6 = sld [smem:[#allocation0]]
  $region65: #{pallas_fwd.1} parent=0
    _
  %s8 = ssub.s32 1, %s6
  %s9 = scalar_select 0, %s8, %s6
  $region1: #{pallas_fwd.1} parent=0
    #allocation2 [shape = 'u8[131072]{0}', space=vmem, size = 0x20000, scoped, tag = 'input window, operand 0']
    #allocation3 [shape = 's32[2]{0}', space=sflag, size = 0x8, scoped, tag = 'scoped memory for pallas_fwd.1']
    #allocation4 [shape = 's32[2]{0}', space=sflag, size = 0x8, scoped, tag = 'scoped memory for pallas_fwd.1']
    #allocation5 [shape = 'u8[32768]{0}', space=vmem, size = 0x8000, scoped, tag = 'input window, operand 1, single buffered']
    #allocation6 [shape = 's32[1]{0}', space=sflag, size = 0x4, scoped, tag = 'scoped memory for pallas_fwd.1']
    #allocation7 [shape = 'u8[32768]{0}', space=vmem, size = 0x8000, scoped, tag = 'input window, operand 3, single buffered']
    #allocation8 [shape = 'u8[131072]{0}', space=vmem, size = 0x20000, scoped, tag = 'output window, operand 0']
    %10 = vsyncpa [#allocation3], 0
    %s11 = scalar_lea.sflag [#allocation3], 1
    %12 = vsyncpa %s11, 0
    %13 = vsyncpa [#allocation6], 0
    %14 = vsyncpa [#allocation4], 0
    %s15 = scalar_lea.sflag [#allocation4], 1
    %16 = vsyncpa %s15, 0
    loop: start=0, step=1, limit=6
    $region2: #{pallas_fwd.1} parent=1 // loop_pre_header
      _
    $region3: #{pallas_fwd.1} parent=1 // loop_header
      %s18 = sphi 0, %s22
      %p19 = scmp.ge.s32.totalorder %s18, 6
      %s28 = sphi 0, %s30
      %s31 = sphi 0, %s28
      %s32 = sphi 0, %s31
      %s48 = sphi 0, %s32
      %s52 = sphi 0, %s52
      %s54 = sphi 0, %s52
      %s55 = sphi 0, %s54
      %s69 = sphi 0, %s55
      %s73 = sphi 0, %s73
      %s75 = sphi 0, %s73
      %s76 = sphi 0, %s75
      %s90 = sphi 0, %s76
      %s94 = sphi 0, %s94
      %s96 = sphi 0, %s94
      %s97 = sphi 0, %s96
      %s111 = sphi 0, %s97
      %s115 = sphi 0, %s115
      %s117 = sphi 0, %s115
      %s118 = sphi 0, %s117
      %s132 = sphi 0, %s118
      %s138 = sphi 0, %s140
      %s141 = sphi 0, %s138
      %s142 = sphi 0, %s141
      %s158 = sphi 0, %s142
    $region4: #{pallas_fwd.1} parent=1 // loop_header_branch
      %21 = sbr.rel (%p19) target = $region8
    $region5: #{pallas_fwd.1} parent=1 // loop_body
      %s23 = ssub.s32 %s18, 1
      %s24 = ssub.s32 %s18, 2
      %s25 = sadd.s32 %s18, 1
      %s26 = ssub.s32 %s18, %s25
      %p27 = scmp.eq.s32.totalorder %s26, 0
      %s29 = sadd.s32 %s28, 1
      %s30 = scalar_select %p27, %s28, %s29
      %p33 = pneg %p27
      %p34 = scmp.eq.s32.totalorder %s18, 3
      %p35 = por %p33, %p34
      %p36 = scmp.ne.s32.totalorder %s28, %s31
      %p37 = scmp.eq.s32.totalorder %s18, 0
      %p38 = por %p36, %p37
      %p39 = scmp.ne.s32.totalorder %s28, %s31
      %p40 = scmp.eq.s32.totalorder %s23, 3
      %p41 = por %p39, %p40
      %p42 = scmp.ne.s32.totalorder %s31, %s32
      %p43 = scmp.eq.s32.totalorder %s23, 0
      %p44 = por %p42, %p43
      %p45 = scmp.ne.s32.totalorder %s31, %s32
      %p46 = scmp.eq.s32.totalorder %s24, 3
      %p47 = por %p45, %p46
      %p49 = scmp.ne.s32.totalorder %s32, %s48
      %p50 = scmp.eq.s32.totalorder %s24, 0
      %p51 = por %p49, %p50
      %s53 = sadd.s32 %s52, 1
      %p56 = scmp.eq.s32.totalorder %s18, 3
      %p57 = scmp.ne.s32.totalorder %s52, %s54
      %p58 = scmp.eq.s32.totalorder %s18, 0
      %p59 = por %p57, %p58
      %p60 = scmp.ne.s32.totalorder %s52, %s54
      %p61 = scmp.eq.s32.totalorder %s23, 3
      %p62 = por %p60, %p61
      %p63 = scmp.ne.s32.totalorder %s54, %s55
      %p64 = scmp.eq.s32.totalorder %s23, 0
      %p65 = por %p63, %p64
      %p66 = scmp.ne.s32.totalorder %s54, %s55
      %p67 = scmp.eq.s32.totalorder %s24, 3
      %p68 = por %p66, %p67
      %p70 = scmp.ne.s32.totalorder %s55, %s69
      %p71 = scmp.eq.s32.totalorder %s24, 0
      %p72 = por %p70, %p71
      %s74 = sadd.s32 %s73, 1
      %p77 = scmp.eq.s32.totalorder %s18, 3
      %p78 = scmp.ne.s32.totalorder %s73, %s75
      %p79 = scmp.eq.s32.totalorder %s18, 0
      %p80 = por %p78, %p79
      %p81 = scmp.ne.s32.totalorder %s73, %s75
      %p82 = scmp.eq.s32.totalorder %s23, 3
      %p83 = por %p81, %p82
      %p84 = scmp.ne.s32.totalorder %s75, %s76
      %p85 = scmp.eq.s32.totalorder %s23, 0
      %p86 = por %p84, %p85
      %p87 = scmp.ne.s32.totalorder %s75, %s76
      %p88 = scmp.eq.s32.totalorder %s24, 3
      %p89 = por %p87, %p88
      %p91 = scmp.ne.s32.totalorder %s76, %s90
      %p92 = scmp.eq.s32.totalorder %s24, 0
      %p93 = por %p91, %p92
      %s95 = sadd.s32 %s94, 1
      %p98 = scmp.eq.s32.totalorder %s18, 3
      %p99 = scmp.ne.s32.totalorder %s94, %s96
      %p100 = scmp.eq.s32.totalorder %s18, 0
      %p101 = por %p99, %p100
      %p102 = scmp.ne.s32.totalorder %s94, %s96
      %p103 = scmp.eq.s32.totalorder %s23, 3
      %p104 = por %p102, %p103
      %p105 = scmp.ne.s32.totalorder %s96, %s97
      %p106 = scmp.eq.s32.totalorder %s23, 0
      %p107 = por %p105, %p106
      %p108 = scmp.ne.s32.totalorder %s96, %s97
      %p109 = scmp.eq.s32.totalorder %s24, 3
      %p110 = por %p108, %p109
      %p112 = scmp.ne.s32.totalorder %s97, %s111
      %p113 = scmp.eq.s32.totalorder %s24, 0
      %p114 = por %p112, %p113
      %s116 = sadd.s32 %s115, 1
      %p119 = scmp.eq.s32.totalorder %s18, 3
      %p120 = scmp.ne.s32.totalorder %s115, %s117
      %p121 = scmp.eq.s32.totalorder %s18, 0
      %p122 = por %p120, %p121
      %p123 = scmp.ne.s32.totalorder %s115, %s117
      %p124 = scmp.eq.s32.totalorder %s23, 3
      %p125 = por %p123, %p124
      %p126 = scmp.ne.s32.totalorder %s117, %s118
      %p127 = scmp.eq.s32.totalorder %s23, 0
      %p128 = por %p126, %p127
      %p129 = scmp.ne.s32.totalorder %s117, %s118
      %p130 = scmp.eq.s32.totalorder %s24, 3
      %p131 = por %p129, %p130
      %p133 = scmp.ne.s32.totalorder %s118, %s132
      %p134 = scmp.eq.s32.totalorder %s24, 0
      %p135 = por %p133, %p134
      %s136 = ssub.s32 %s18, %s25
      %p137 = scmp.eq.s32.totalorder %s136, 0
      %s139 = sadd.s32 %s138, 1
      %s140 = scalar_select %p137, %s138, %s139
      %p143 = pneg %p137
      %p144 = scmp.eq.s32.totalorder %s18, 3
      %p145 = por %p143, %p144
      %p146 = scmp.ne.s32.totalorder %s138, %s141
      %p147 = scmp.eq.s32.totalorder %s18, 0
      %p148 = por %p146, %p147
      %p149 = scmp.ne.s32.totalorder %s138, %s141
      %p150 = scmp.eq.s32.totalorder %s23, 3
      %p151 = por %p149, %p150
      %p152 = scmp.ne.s32.totalorder %s141, %s142
      %p153 = scmp.eq.s32.totalorder %s23, 0
      %p154 = por %p152, %p153
      %p155 = scmp.ne.s32.totalorder %s141, %s142
      %p156 = scmp.eq.s32.totalorder %s24, 3
      %p157 = por %p155, %p156
      %p159 = scmp.ne.s32.totalorder %s142, %s158
      %p160 = scmp.eq.s32.totalorder %s24, 0
      %p161 = por %p159, %p160
      %p162 = scmp.le.s32.totalorder 1, %s18
      %p163 = scmp.lt.s32.totalorder %s18, 5
      %p164 = pnand %p162, %p163
      %p165 = pneg %p164
      // Predicated region
      $region9: #{pallas_fwd.1} parent=5 // pred_check
        _
      $region10: #{pallas_fwd.1} parent=5 // pred_check_branch
        %167 = sbr.rel (%p164) target = $region12
      $region11: #{pallas_fwd.1} parent=5 // pred_region
        %s168 = ssub.s32 %s18, 1
        // Predicated region
        $region13: #{pallas_fwd.1} parent=11 // pred_check
          %p169 = pneg %p65
        $region14: #{pallas_fwd.1} parent=11 // pred_check_branch
          %171 = sbr.rel (%p169) target = $region16
        $region15: #{pallas_fwd.1} parent=11 // pred_region
          %s173 = ssub.s32 1024, 1024
          %174 = vsyncadd [#allocation6], %s173
          %s175 = sshll.u32 [#allocation5], 4
          %s176 = int_to_ptr.vmem [resolvable:$true] %s175
          %181 = dma.hbm_to_vmem [thread:$0]  %s1, 1024, %s176, [#allocation6], 64, 64, 4
        $region16: #{pallas_fwd.1} parent=11 // pred_fallthru
          _
        // Predicated region
        $region17: #{pallas_fwd.1} parent=11 // pred_check
          %p182 = pneg %p86
        $region18: #{pallas_fwd.1} parent=11 // pred_check_branch
          %184 = sbr.rel (%p182) target = $region20
        $region19: #{pallas_fwd.1} parent=11 // pred_region
          _
        $region20: #{pallas_fwd.1} parent=11 // pred_fallthru
          _
        // Predicated region
        $region21: #{pallas_fwd.1} parent=11 // pred_check
          %p185 = pneg %p107
        $region22: #{pallas_fwd.1} parent=11 // pred_check_branch
          %187 = sbr.rel (%p185) target = $region24
        $region23: #{pallas_fwd.1} parent=11 // pred_region
          %s189 = ssub.s32 1024, 1024
          %190 = vsyncadd [#allocation6], %s189
          %s191 = sshll.u32 [#allocation7], 4
          %s192 = int_to_ptr.vmem [resolvable:$true] %s191
          %197 = dma.hbm_to_vmem [thread:$0]  %s3, 1024, %s192, [#allocation6], 64, 64, 4
        $region24: #{pallas_fwd.1} parent=11 // pred_fallthru
          _
        // Predicated region
        $region25: #{pallas_fwd.1} parent=11 // pred_check
          %p198 = pneg %p128
        $region26: #{pallas_fwd.1} parent=11 // pred_check_branch
          %200 = sbr.rel (%p198) target = $region28
        $region27: #{pallas_fwd.1} parent=11 // pred_region
          _
        $region28: #{pallas_fwd.1} parent=11 // pred_fallthru
          _
      $region12: #{pallas_fwd.1} parent=5 // pred_fallthru
        _
      %p201 = scmp.lt.s32.totalorder %s18, 4
      // Predicated region
      $region29: #{pallas_fwd.1} parent=5 // pred_check
        %p202 = pneg %p201
      $region30: #{pallas_fwd.1} parent=5 // pred_check_branch
        %204 = sbr.rel (%p202) target = $region32
      $region31: #{pallas_fwd.1} parent=5 // pred_region
        // Predicated region
        $region33: #{pallas_fwd.1} parent=31 // pred_check
          %p205 = pneg %p38
        $region34: #{pallas_fwd.1} parent=31 // pred_check_branch
          %207 = sbr.rel (%p205) target = $region36
        $region35: #{pallas_fwd.1} parent=31 // pred_region
          %s208 = sand.u32 %s28, 1
          %s209 = scalar_lea.sflag [#allocation3], %s208
          %s210 = sand.u32 %s28, 1
          %s211 = smul.addr %s210, 128
          %s212 = scalar_lea.vmem [#allocation2], %s211
          %s213 = smul.u32 16, %s18
          %s215 = ssub.s32 2048, 2048
          %216 = vsyncadd %s209, %s215
          %s217 = smul.addr %s213, 128
          %s218 = scalar_lea.hbm %s0, %s217
          %s219 = sshll.u32 %s212, 4
          %s220 = int_to_ptr.vmem [resolvable:$true] %s219
          %225 = dma.hbm_to_vmem [thread:$0]  %s218, 2048, %s220, %s209, 128, 128, 8
        $region36: #{pallas_fwd.1} parent=31 // pred_fallthru
          _
      $region32: #{pallas_fwd.1} parent=5 // pred_fallthru
        _
      %p226 = scmp.le.s32.totalorder 1, %s18
      %p227 = scmp.lt.s32.totalorder %s18, 5
      %p228 = pnand %p226, %p227
      %p229 = pneg %p228
      // Predicated region
      $region37: #{pallas_fwd.1} parent=5 // pred_check
        _
      $region38: #{pallas_fwd.1} parent=5 // pred_check_branch
        %231 = sbr.rel (%p228) target = $region40
      $region39: #{pallas_fwd.1} parent=5 // pred_region
        %s232 = ssub.s32 %s18, 1
        %s233 = sand.u32 %s31, 1
        %s234 = scalar_lea.sflag [#allocation3], %s233
        %s235 = sand.u32 %s31, 1
        %s236 = smul.addr %s235, 128
        %s237 = scalar_lea.vmem [#allocation2], %s236
        // Predicated region
        $region41: #{pallas_fwd.1} parent=39 // pred_check
          %p238 = pneg %p44
        $region42: #{pallas_fwd.1} parent=39 // pred_check_branch
          %240 = sbr.rel (%p238) target = $region44
        $region43: #{pallas_fwd.1} parent=39 // pred_region
          %241 = dma.done %s234, 2048
        $region44: #{pallas_fwd.1} parent=39 // pred_fallthru
          _
        // Predicated region
        $region45: #{pallas_fwd.1} parent=39 // pred_check
          %p242 = pneg %p65
        $region46: #{pallas_fwd.1} parent=39 // pred_check_branch
          %244 = sbr.rel (%p242) target = $region48
        $region47: #{pallas_fwd.1} parent=39 // pred_region
          %245 = dma.done [#allocation6], 1024
        $region48: #{pallas_fwd.1} parent=39 // pred_fallthru
          _
        // Predicated region
        $region49: #{pallas_fwd.1} parent=39 // pred_check
          %p246 = pneg %p107
        $region50: #{pallas_fwd.1} parent=39 // pred_check_branch
          %248 = sbr.rel (%p246) target = $region52
        $region51: #{pallas_fwd.1} parent=39 // pred_region
          %249 = dma.done [#allocation6], 1024
        $region52: #{pallas_fwd.1} parent=39 // pred_fallthru
          _
        %s250 = sand.u32 %s31, 1
        %s251 = scalar_lea.sflag [#allocation3], %s250
        %s252 = sand.u32 %s31, 1
        %s253 = smul.addr %s252, 128
        %s254 = scalar_lea.vmem [#allocation2], %s253
        %p255 = pneg %p44
        %p256 = pneg %p41
        %p257 = pneg %p65
        %p258 = pneg %p62
        %p259 = pneg %p86
        %p260 = pneg %p83
        %p261 = pneg %p107
        %p262 = pneg %p104
        %p263 = pneg %p128
        %p264 = pneg %p125
        %p265 = pneg %p154
        %p266 = pneg %p151
        %s267 = sand.u32 %s141, 1
        %s268 = scalar_lea.sflag [#allocation4], %s267
        %s269 = sand.u32 %s141, 1
        %s270 = smul.addr %s269, 128
        %s271 = scalar_lea.vmem [#allocation8], %s270
        %s272 = smul.u32 16, %s23
        %s273 = smul.u32 16, %s23
        %v275 = vld [vmem:[%s237] sm:$0xff]
        %v276 = vld [vmem:[%s237 + $0x8] sm:$0xff]
        %v277 = vld [vmem:[%s237 + $0x10] sm:$0xff]
        %v278 = vld [vmem:[%s237 + $0x18] sm:$0xff]
        %v279 = vld [vmem:[%s237 + $0x20] sm:$0xff]
        %v280 = vld [vmem:[%s237 + $0x28] sm:$0xff]
        %v281 = vld [vmem:[%s237 + $0x30] sm:$0xff]
        %v282 = vld [vmem:[%s237 + $0x38] sm:$0xff]
        %v283 = vld [vmem:[%s237 + $0x40] sm:$0xff]
        %v284 = vld [vmem:[%s237 + $0x48] sm:$0xff]
        %v285 = vld [vmem:[%s237 + $0x50] sm:$0xff]
        %v286 = vld [vmem:[%s237 + $0x58] sm:$0xff]
        %v287 = vld [vmem:[%s237 + $0x60] sm:$0xff]
        %v288 = vld [vmem:[%s237 + $0x68] sm:$0xff]
        %v289 = vld [vmem:[%s237 + $0x70] sm:$0xff]
        %v290 = vld [vmem:[%s237 + $0x78] sm:$0xff]
        %v291 = vld [vmem:[#allocation5] sm:$0xf]
        %v292 = vld [vmem:[#allocation5 + $0x4] sm:$0xf]
        %v293 = vld [vmem:[#allocation5 + $0x8] sm:$0xf]
        %v294 = vld [vmem:[#allocation5 + $0xc] sm:$0xf]
        %v295 = vld [vmem:[#allocation5 + $0x10] sm:$0xf]
        %v296 = vld [vmem:[#allocation5 + $0x14] sm:$0xf]
        %v297 = vld [vmem:[#allocation5 + $0x18] sm:$0xf]
        %v298 = vld [vmem:[#allocation5 + $0x1c] sm:$0xf]
        %v299 = vld [vmem:[#allocation5 + $0x20] sm:$0xf]
        %v300 = vld [vmem:[#allocation5 + $0x24] sm:$0xf]
        %v301 = vld [vmem:[#allocation5 + $0x28] sm:$0xf]
        %v302 = vld [vmem:[#allocation5 + $0x2c] sm:$0xf]
        %v303 = vld [vmem:[#allocation5 + $0x30] sm:$0xf]
        %v304 = vld [vmem:[#allocation5 + $0x34] sm:$0xf]
        %v305 = vld [vmem:[#allocation5 + $0x38] sm:$0xf]
        %v306 = vld [vmem:[#allocation5 + $0x3c] sm:$0xf]
        %v307 = vld [vmem:[%s2] sm:$0x1]
        %v308 = vld [vmem:[#allocation7] sm:$0xf]
        %v309 = vld [vmem:[#allocation7 + $0x4] sm:$0xf]
        %v310 = vld [vmem:[#allocation7 + $0x8] sm:$0xf]
        %v311 = vld [vmem:[#allocation7 + $0xc] sm:$0xf]
        %v312 = vld [vmem:[#allocation7 + $0x10] sm:$0xf]
        %v313 = vld [vmem:[#allocation7 + $0x14] sm:$0xf]
        %v314 = vld [vmem:[#allocation7 + $0x18] sm:$0xf]
        %v315 = vld [vmem:[#allocation7 + $0x1c] sm:$0xf]
        %v316 = vld [vmem:[#allocation7 + $0x20] sm:$0xf]
        %v317 = vld [vmem:[#allocation7 + $0x24] sm:$0xf]
        %v318 = vld [vmem:[#allocation7 + $0x28] sm:$0xf]
        %v319 = vld [vmem:[#allocation7 + $0x2c] sm:$0xf]
        %v320 = vld [vmem:[#allocation7 + $0x30] sm:$0xf]
        %v321 = vld [vmem:[#allocation7 + $0x34] sm:$0xf]
        %v322 = vld [vmem:[#allocation7 + $0x38] sm:$0xf]
        %v323 = vld [vmem:[#allocation7 + $0x3c] sm:$0xf]
        %v324 = vld [vmem:[%s4] sm:$0x1]
        %v325 = vpack.c.bf16 %v276, %v275
        %v326 = vpack.c.bf16 %v278, %v277
        %v327 = vpack.c.bf16 %v280, %v279
        %v328 = vpack.c.bf16 %v282, %v281
        %v329 = vpack.c.bf16 %v284, %v283
        %v330 = vpack.c.bf16 %v286, %v285
        %v331 = vpack.c.bf16 %v288, %v287
        %v332 = vpack.c.bf16 %v290, %v289
        %v334 = vlaneseq
        %v335 = vshrl.u32 %v334, 7
        %v336 = vsub.s32 0, %v335
        %v337 = vrot.slane %v307, %v336
        %v355 = vunpack.c.l.b16 %v291
        %v356 = vunpack.c.l.b16 %v292
        %v357 = vunpack.c.l.b16 %v293
        %v358 = vunpack.c.l.b16 %v294
        %v359 = vunpack.c.l.b16 %v295
        %v360 = vunpack.c.l.b16 %v296
        %v361 = vunpack.c.l.b16 %v297
        %v362 = vunpack.c.l.b16 %v298
        %v363 = vunpack.c.l.b16 %v299
        %v364 = vunpack.c.l.b16 %v300
        %v365 = vunpack.c.l.b16 %v301
        %v366 = vunpack.c.l.b16 %v302
        %v367 = vunpack.c.l.b16 %v303
        %v368 = vunpack.c.l.b16 %v304
        %v369 = vunpack.c.l.b16 %v305
        %v370 = vunpack.c.l.b16 %v306
        %v371 = vpack.c.b16 %v356, %v355
        %v372 = vpack.c.b16 %v358, %v357
        %v373 = vpack.c.b16 %v360, %v359
        %v374 = vpack.c.b16 %v362, %v361
        %v375 = vpack.c.b16 %v364, %v363
        %v376 = vpack.c.b16 %v366, %v365
        %v377 = vpack.c.b16 %v368, %v367
        %v378 = vpack.c.b16 %v370, %v369
        %387 = vmatprep.subr.bf16.mxu0 0
        %388 = vmatpush1.bf16.msra.mxu0 %v371
        %389 = vmatprep.subr.bf16.mxu0 0
        %390 = vmatpush1.bf16.msra.mxu0 %v372
        %391 = vmatprep.subr.bf16.mxu0 0
        %392 = vmatpush1.bf16.msra.mxu0 %v373
        %393 = vmatprep.subr.bf16.mxu0 0
        %394 = vmatpush1.bf16.msra.mxu0 %v374
        %395 = vmatprep.subr.bf16.mxu0 0
        %396 = vmatpush1.bf16.msra.mxu0 %v375
        %397 = vmatprep.subr.bf16.mxu0 0
        %398 = vmatpush1.bf16.msra.mxu0 %v376
        %399 = vmatprep.subr.bf16.mxu0 0
        %400 = vmatpush1.bf16.msra.mxu0 %v377
        %401 = vmatprep.subr.bf16.mxu0 0
        %402 = vmatpush1.bf16.msra.mxu0 %v378
        %403 = vmatprep.subr.bf16.mxu0 0
        %404 = vmatpush1.bf16.msra.mxu0 0
        %405 = vmatprep.subr.bf16.mxu0 0
        %406 = vmatpush1.bf16.msra.mxu0 0
        %407 = vmatprep.subr.bf16.mxu0 0
        %408 = vmatpush1.bf16.msra.mxu0 0
        %409 = vmatprep.subr.bf16.mxu0 0
        %410 = vmatpush1.bf16.msra.mxu0 0
        %411 = vmatprep.subr.bf16.mxu0 0
        %412 = vmatpush1.bf16.msra.mxu0 0
        %413 = vmatprep.subr.bf16.mxu0 0
        %414 = vmatpush1.bf16.msra.mxu0 0
        %415 = vmatprep.subr.bf16.mxu0 0
        %416 = vmatpush1.bf16.msra.mxu0 0
        %417 = vmatprep.subr.bf16.mxu0 0
        %418 = vmatpush1.bf16.msra.mxu0 0
        %419 = vmatprep.mubr.bf16.mxu0 0
        %420 = vmatmul.mubr.bf16.gmra.mrb[0].mxu0 %v325
        %v421 = vpop.f32.mrb[0].mxu0
        %v422 = vadd.f32 %v337, %v421
        %v423 = vpop.f32.mrb[0].mxu0
        %v424 = vpop.f32.mrb[0].mxu0
        %v425 = vadd.f32 %v337, %v424
        %v426 = vpop.f32.mrb[0].mxu0
        %427 = vmatprep.mubr.bf16.mxu0 0
        %428 = vmatmul.mubr.bf16.gmra.mrb[0].mxu0 %v326
        %v429 = vpop.f32.mrb[0].mxu0
        %v430 = vadd.f32 %v337, %v429
        %v431 = vpop.f32.mrb[0].mxu0
        %v432 = vpop.f32.mrb[0].mxu0
        %v433 = vadd.f32 %v337, %v432
        %v434 = vpop.f32.mrb[0].mxu0
        %435 = vmatprep.mubr.bf16.mxu0 0
        %436 = vmatmul.mubr.bf16.gmra.mrb[0].mxu0 %v327
        %v437 = vpop.f32.mrb[0].mxu0
        %v438 = vadd.f32 %v337, %v437
        %v439 = vpop.f32.mrb[0].mxu0
        %v440 = vpop.f32.mrb[0].mxu0
        %v441 = vadd.f32 %v337, %v440
        %v442 = vpop.f32.mrb[0].mxu0
        %443 = vmatprep.mubr.bf16.mxu0 0
        %444 = vmatmul.mubr.bf16.gmra.mrb[0].mxu0 %v328
        %v445 = vpop.f32.mrb[0].mxu0
        %v446 = vadd.f32 %v337, %v445
        %v447 = vpop.f32.mrb[0].mxu0
        %v448 = vpop.f32.mrb[0].mxu0
        %v449 = vadd.f32 %v337, %v448
        %v450 = vpop.f32.mrb[0].mxu0
        %451 = vmatprep.mubr.bf16.mxu0 0
        %452 = vmatmul.mubr.bf16.gmra.mrb[0].mxu0 %v329
        %v453 = vpop.f32.mrb[0].mxu0
        %v454 = vadd.f32 %v337, %v453
        %v455 = vpop.f32.mrb[0].mxu0
        %v456 = vpop.f32.mrb[0].mxu0
        %v457 = vadd.f32 %v337, %v456
        %v458 = vpop.f32.mrb[0].mxu0
        %459 = vmatprep.mubr.bf16.mxu0 0
        %460 = vmatmul.mubr.bf16.gmra.mrb[0].mxu0 %v330
        %v461 = vpop.f32.mrb[0].mxu0
        %v462 = vadd.f32 %v337, %v461
        %v463 = vpop.f32.mrb[0].mxu0
        %v464 = vpop.f32.mrb[0].mxu0
        %v465 = vadd.f32 %v337, %v464
        %v466 = vpop.f32.mrb[0].mxu0
        %467 = vmatprep.mubr.bf16.mxu0 0
        %468 = vmatmul.mubr.bf16.gmra.mrb[0].mxu0 %v331
        %v469 = vpop.f32.mrb[0].mxu0
        %v470 = vadd.f32 %v337, %v469
        %v471 = vpop.f32.mrb[0].mxu0
        %v472 = vpop.f32.mrb[0].mxu0
        %v473 = vadd.f32 %v337, %v472
        %v474 = vpop.f32.mrb[0].mxu0
        %475 = vmatprep.mubr.bf16.mxu0 0
        %476 = vmatmul.mubr.bf16.gmra.mrb[0].mxu0 %v332
        %v477 = vpop.f32.mrb[0].mxu0
        %v478 = vadd.f32 %v337, %v477
        %v479 = vpop.f32.mrb[0].mxu0
        %v480 = vpop.f32.mrb[0].mxu0
        %v481 = vadd.f32 %v337, %v480
        %v482 = vpop.f32.mrb[0].mxu0
        %483 = vdwg.mxu0
        %v484 = vxor.u32 %v422, 2147483648
        %v485 = vxor.u32 %v425, 2147483648
        %v486 = vxor.u32 %v430, 2147483648
        %v487 = vxor.u32 %v433, 2147483648
        %v488 = vxor.u32 %v438, 2147483648
        %v489 = vxor.u32 %v441, 2147483648
        %v490 = vxor.u32 %v446, 2147483648
        %v491 = vxor.u32 %v449, 2147483648
        %v492 = vxor.u32 %v454, 2147483648
        %v493 = vxor.u32 %v457, 2147483648
        %v494 = vxor.u32 %v462, 2147483648
        %v495 = vxor.u32 %v465, 2147483648
        %v496 = vxor.u32 %v470, 2147483648
        %v497 = vxor.u32 %v473, 2147483648
        %v498 = vxor.u32 %v478, 2147483648
        %v499 = vxor.u32 %v481, 2147483648
        %v500 = vmul.f32 %v484, 1.442695
        %v501 = vpow.pop %v500
        %v502 = vmul.f32 %v485, 1.442695
        %v503 = vpow.pop %v502
        %v504 = vmul.f32 %v486, 1.442695
        %v505 = vpow.pop %v504
        %v506 = vmul.f32 %v487, 1.442695
        %v507 = vpow.pop %v506
        %v508 = vmul.f32 %v488, 1.442695
        %v509 = vpow.pop %v508
        %v510 = vmul.f32 %v489, 1.442695
        %v511 = vpow.pop %v510
        %v512 = vmul.f32 %v490, 1.442695
        %v513 = vpow.pop %v512
        %v514 = vmul.f32 %v491, 1.442695
        %v515 = vpow.pop %v514
        %v516 = vmul.f32 %v492, 1.442695
        %v517 = vpow.pop %v516
        %v518 = vmul.f32 %v493, 1.442695
        %v519 = vpow.pop %v518
        %v520 = vmul.f32 %v494, 1.442695
        %v521 = vpow.pop %v520
        %v522 = vmul.f32 %v495, 1.442695
        %v523 = vpow.pop %v522
        %v524 = vmul.f32 %v496, 1.442695
        %v525 = vpow.pop %v524
        %v526 = vmul.f32 %v497, 1.442695
        %v527 = vpow.pop %v526
        %v528 = vmul.f32 %v498, 1.442695
        %v529 = vpow.pop %v528
        %v530 = vmul.f32 %v499, 1.442695
        %v531 = vpow.pop %v530
        %v532 = vadd.f32 %v501, 1.0
        %v533 = vadd.f32 %v503, 1.0
        %v534 = vadd.f32 %v505, 1.0
        %v535 = vadd.f32 %v507, 1.0
        %v536 = vadd.f32 %v509, 1.0
        %v537 = vadd.f32 %v511, 1.0
        %v538 = vadd.f32 %v513, 1.0
        %v539 = vadd.f32 %v515, 1.0
        %v540 = vadd.f32 %v517, 1.0
        %v541 = vadd.f32 %v519, 1.0
        %v542 = vadd.f32 %v521, 1.0
        %v543 = vadd.f32 %v523, 1.0
        %v544 = vadd.f32 %v525, 1.0
        %v545 = vadd.f32 %v527, 1.0
        %v546 = vadd.f32 %v529, 1.0
        %v547 = vadd.f32 %v531, 1.0
        %v548 = vrcp.pop %v532
        %v549 = vmul.f32 1.0, %v548
        %v550 = vrcp.pop %v533
        %v551 = vmul.f32 1.0, %v550
        %v552 = vrcp.pop %v534
        %v553 = vmul.f32 1.0, %v552
        %v554 = vrcp.pop %v535
        %v555 = vmul.f32 1.0, %v554
        %v556 = vrcp.pop %v536
        %v557 = vmul.f32 1.0, %v556
        %v558 = vrcp.pop %v537
        %v559 = vmul.f32 1.0, %v558
        %v560 = vrcp.pop %v538
        %v561 = vmul.f32 1.0, %v560
        %v562 = vrcp.pop %v539
        %v563 = vmul.f32 1.0, %v562
        %v564 = vrcp.pop %v540
        %v565 = vmul.f32 1.0, %v564
        %v566 = vrcp.pop %v541
        %v567 = vmul.f32 1.0, %v566
        %v568 = vrcp.pop %v542
        %v569 = vmul.f32 1.0, %v568
        %v570 = vrcp.pop %v543
        %v571 = vmul.f32 1.0, %v570
        %v572 = vrcp.pop %v544
        %v573 = vmul.f32 1.0, %v572
        %v574 = vrcp.pop %v545
        %v575 = vmul.f32 1.0, %v574
        %v576 = vrcp.pop %v546
        %v577 = vmul.f32 1.0, %v576
        %v578 = vrcp.pop %v547
        %v579 = vmul.f32 1.0, %v578
        %v580 = vmul.f32 %v422, %v549
        %v581 = vmul.f32 %v425, %v551
        %v582 = vmul.f32 %v430, %v553
        %v583 = vmul.f32 %v433, %v555
        %v584 = vmul.f32 %v438, %v557
        %v585 = vmul.f32 %v441, %v559
        %v586 = vmul.f32 %v446, %v561
        %v587 = vmul.f32 %v449, %v563
        %v588 = vmul.f32 %v454, %v565
        %v589 = vmul.f32 %v457, %v567
        %v590 = vmul.f32 %v462, %v569
        %v591 = vmul.f32 %v465, %v571
        %v592 = vmul.f32 %v470, %v573
        %v593 = vmul.f32 %v473, %v575
        %v594 = vmul.f32 %v478, %v577
        %v595 = vmul.f32 %v481, %v579
        %v596 = vpack.c.bf16 %v581, %v580
        %v597 = vpack.c.bf16 %v583, %v582
        %v598 = vpack.c.bf16 %v585, %v584
        %v599 = vpack.c.bf16 %v587, %v586
        %v600 = vpack.c.bf16 %v589, %v588
        %v601 = vpack.c.bf16 %v591, %v590
        %v602 = vpack.c.bf16 %v593, %v592
        %v603 = vpack.c.bf16 %v595, %v594
        %v605 = vlaneseq
        %v606 = vshrl.u32 %v605, 7
        %v607 = vsub.s32 0, %v606
        %v608 = vrot.slane %v324, %v607
        %v626 = vunpack.c.l.b16 %v308
        %v627 = vunpack.c.l.b16 %v309
        %v628 = vunpack.c.l.b16 %v310
        %v629 = vunpack.c.l.b16 %v311
        %v630 = vunpack.c.l.b16 %v312
        %v631 = vunpack.c.l.b16 %v313
        %v632 = vunpack.c.l.b16 %v314
        %v633 = vunpack.c.l.b16 %v315
        %v634 = vunpack.c.l.b16 %v316
        %v635 = vunpack.c.l.b16 %v317
        %v636 = vunpack.c.l.b16 %v318
        %v637 = vunpack.c.l.b16 %v319
        %v638 = vunpack.c.l.b16 %v320
        %v639 = vunpack.c.l.b16 %v321
        %v640 = vunpack.c.l.b16 %v322
        %v641 = vunpack.c.l.b16 %v323
        %v642 = vpack.c.b16 %v627, %v626
        %v643 = vpack.c.b16 %v629, %v628
        %v644 = vpack.c.b16 %v631, %v630
        %v645 = vpack.c.b16 %v633, %v632
        %v646 = vpack.c.b16 %v635, %v634
        %v647 = vpack.c.b16 %v637, %v636
        %v648 = vpack.c.b16 %v639, %v638
        %v649 = vpack.c.b16 %v641, %v640
        %658 = vmatprep.subr.bf16.mxu0 0
        %659 = vmatpush1.bf16.msra.mxu0 %v642
        %660 = vmatprep.subr.bf16.mxu0 0
        %661 = vmatpush1.bf16.msra.mxu0 %v643
        %662 = vmatprep.subr.bf16.mxu0 0
        %663 = vmatpush1.bf16.msra.mxu0 %v644
        %664 = vmatprep.subr.bf16.mxu0 0
        %665 = vmatpush1.bf16.msra.mxu0 %v645
        %666 = vmatprep.subr.bf16.mxu0 0
        %667 = vmatpush1.bf16.msra.mxu0 %v646
        %668 = vmatprep.subr.bf16.mxu0 0
        %669 = vmatpush1.bf16.msra.mxu0 %v647
        %670 = vmatprep.subr.bf16.mxu0 0
        %671 = vmatpush1.bf16.msra.mxu0 %v648
        %672 = vmatprep.subr.bf16.mxu0 0
        %673 = vmatpush1.bf16.msra.mxu0 %v649
        %674 = vmatprep.subr.bf16.mxu0 0
        %675 = vmatpush1.bf16.msra.mxu0 0
        %676 = vmatprep.subr.bf16.mxu0 0
        %677 = vmatpush1.bf16.msra.mxu0 0
        %678 = vmatprep.subr.bf16.mxu0 0
        %679 = vmatpush1.bf16.msra.mxu0 0
        %680 = vmatprep.subr.bf16.mxu0 0
        %681 = vmatpush1.bf16.msra.mxu0 0
        %682 = vmatprep.subr.bf16.mxu0 0
        %683 = vmatpush1.bf16.msra.mxu0 0
        %684 = vmatprep.subr.bf16.mxu0 0
        %685 = vmatpush1.bf16.msra.mxu0 0
        %686 = vmatprep.subr.bf16.mxu0 0
        %687 = vmatpush1.bf16.msra.mxu0 0
        %688 = vmatprep.subr.bf16.mxu0 0
        %689 = vmatpush1.bf16.msra.mxu0 0
        %690 = vmatprep.mubr.bf16.mxu0 0
        %691 = vmatmul.mubr.bf16.gmra.mrb[0].mxu0 %v596
        %v692 = vpop.f32.mrb[0].mxu0
        %v693 = vadd.f32 %v608, %v692
        %v694 = vpop.f32.mrb[0].mxu0
        %v695 = vpop.f32.mrb[0].mxu0
        %v696 = vadd.f32 %v608, %v695
        %v697 = vpop.f32.mrb[0].mxu0
        %698 = vmatprep.mubr.bf16.mxu0 0
        %699 = vmatmul.mubr.bf16.gmra.mrb[0].mxu0 %v597
        %v700 = vpop.f32.mrb[0].mxu0
        %v701 = vadd.f32 %v608, %v700
        %v702 = vpop.f32.mrb[0].mxu0
        %v703 = vpop.f32.mrb[0].mxu0
        %v704 = vadd.f32 %v608, %v703
        %v705 = vpop.f32.mrb[0].mxu0
        %706 = vmatprep.mubr.bf16.mxu0 0
        %707 = vmatmul.mubr.bf16.gmra.mrb[0].mxu0 %v598
        %v708 = vpop.f32.mrb[0].mxu0
        %v709 = vadd.f32 %v608, %v708
        %v710 = vpop.f32.mrb[0].mxu0
        %v711 = vpop.f32.mrb[0].mxu0
        %v712 = vadd.f32 %v608, %v711
        %v713 = vpop.f32.mrb[0].mxu0
        %714 = vmatprep.mubr.bf16.mxu0 0
        %715 = vmatmul.mubr.bf16.gmra.mrb[0].mxu0 %v599
        %v716 = vpop.f32.mrb[0].mxu0
        %v717 = vadd.f32 %v608, %v716
        %v718 = vpop.f32.mrb[0].mxu0
        %v719 = vpop.f32.mrb[0].mxu0
        %v720 = vadd.f32 %v608, %v719
        %v721 = vpop.f32.mrb[0].mxu0
        %722 = vmatprep.mubr.bf16.mxu0 0
        %723 = vmatmul.mubr.bf16.gmra.mrb[0].mxu0 %v600
        %v724 = vpop.f32.mrb[0].mxu0
        %v725 = vadd.f32 %v608, %v724
        %v726 = vpop.f32.mrb[0].mxu0
        %v727 = vpop.f32.mrb[0].mxu0
        %v728 = vadd.f32 %v608, %v727
        %v729 = vpop.f32.mrb[0].mxu0
        %730 = vmatprep.mubr.bf16.mxu0 0
        %731 = vmatmul.mubr.bf16.gmra.mrb[0].mxu0 %v601
        %v732 = vpop.f32.mrb[0].mxu0
        %v733 = vadd.f32 %v608, %v732
        %v734 = vpop.f32.mrb[0].mxu0
        %v735 = vpop.f32.mrb[0].mxu0
        %v736 = vadd.f32 %v608, %v735
        %v737 = vpop.f32.mrb[0].mxu0
        %738 = vmatprep.mubr.bf16.mxu0 0
        %739 = vmatmul.mubr.bf16.gmra.mrb[0].mxu0 %v602
        %v740 = vpop.f32.mrb[0].mxu0
        %v741 = vadd.f32 %v608, %v740
        %v742 = vpop.f32.mrb[0].mxu0
        %v743 = vpop.f32.mrb[0].mxu0
        %v744 = vadd.f32 %v608, %v743
        %v745 = vpop.f32.mrb[0].mxu0
        %746 = vmatprep.mubr.bf16.mxu0 0
        %747 = vmatmul.mubr.bf16.gmra.mrb[0].mxu0 %v603
        %v748 = vpop.f32.mrb[0].mxu0
        %v749 = vadd.f32 %v608, %v748
        %v750 = vpop.f32.mrb[0].mxu0
        %v751 = vpop.f32.mrb[0].mxu0
        %v752 = vadd.f32 %v608, %v751
        %v753 = vpop.f32.mrb[0].mxu0
        %754 = vdwg.mxu0
        %v755 = vadd.f32 %v693, %v275
        %v756 = vadd.f32 %v696, %v276
        %v757 = vadd.f32 %v701, %v277
        %v758 = vadd.f32 %v704, %v278
        %v759 = vadd.f32 %v709, %v279
        %v760 = vadd.f32 %v712, %v280
        %v761 = vadd.f32 %v717, %v281
        %v762 = vadd.f32 %v720, %v282
        %v763 = vadd.f32 %v725, %v283
        %v764 = vadd.f32 %v728, %v284
        %v765 = vadd.f32 %v733, %v285
        %v766 = vadd.f32 %v736, %v286
        %v767 = vadd.f32 %v741, %v287
        %v768 = vadd.f32 %v744, %v288
        %v769 = vadd.f32 %v749, %v289
        %v770 = vadd.f32 %v752, %v290
        %771 = vst [vmem:[%s271] sm:$0xff] %v755
        %772 = vst [vmem:[%s271 + $0x8] sm:$0xff] %v756
        %773 = vst [vmem:[%s271 + $0x10] sm:$0xff] %v757
        %774 = vst [vmem:[%s271 + $0x18] sm:$0xff] %v758
        %775 = vst [vmem:[%s271 + $0x20] sm:$0xff] %v759
        %776 = vst [vmem:[%s271 + $0x28] sm:$0xff] %v760
        %777 = vst [vmem:[%s271 + $0x30] sm:$0xff] %v761
        %778 = vst [vmem:[%s271 + $0x38] sm:$0xff] %v762
        %779 = vst [vmem:[%s271 + $0x40] sm:$0xff] %v763
        %780 = vst [vmem:[%s271 + $0x48] sm:$0xff] %v764
        %781 = vst [vmem:[%s271 + $0x50] sm:$0xff] %v765
        %782 = vst [vmem:[%s271 + $0x58] sm:$0xff] %v766
        %783 = vst [vmem:[%s271 + $0x60] sm:$0xff] %v767
        %784 = vst [vmem:[%s271 + $0x68] sm:$0xff] %v768
        %785 = vst [vmem:[%s271 + $0x70] sm:$0xff] %v769
        %786 = vst [vmem:[%s271 + $0x78] sm:$0xff] %v770
        %s787 = sand.u32 %s141, 1
        %s788 = scalar_lea.sflag [#allocation4], %s787
        %s789 = sand.u32 %s141, 1
        %s790 = smul.addr %s789, 128
        %s791 = scalar_lea.vmem [#allocation8], %s790
        // Predicated region
        $region53: #{pallas_fwd.1} parent=39 // pred_check
          %p792 = pneg %p151
        $region54: #{pallas_fwd.1} parent=39 // pred_check_branch
          %794 = sbr.rel (%p792) target = $region56
        $region55: #{pallas_fwd.1} parent=39 // pred_region
          %s795 = smul.u32 16, %s23
          %s797 = ssub.s32 2048, 2048
          %798 = vsyncadd %s788, %s797
          %s799 = smul.addr %s795, 128
          %s800 = scalar_lea.hbm %s5, %s799
          %s801 = sshll.u32 %s791, 4
          %s802 = int_to_ptr.vmem [resolvable:$true] %s801
          %807 = dma.vmem_to_hbm [thread:$0]  %s802, 2048, %s800, %s788, 128, 128, 8
        $region56: #{pallas_fwd.1} parent=39 // pred_fallthru
          _
      $region40: #{pallas_fwd.1} parent=5 // pred_fallthru
        _
      %p808 = scmp.le.s32.totalorder 2, %s18
      // Predicated region
      $region57: #{pallas_fwd.1} parent=5 // pred_check
        %p809 = pneg %p808
      $region58: #{pallas_fwd.1} parent=5 // pred_check_branch
        %811 = sbr.rel (%p809) target = $region60
      $region59: #{pallas_fwd.1} parent=5 // pred_region
        %s812 = ssub.s32 %s18, 2
        // Predicated region
        $region61: #{pallas_fwd.1} parent=59 // pred_check
          %p813 = pneg %p157
        $region62: #{pallas_fwd.1} parent=59 // pred_check_branch
          %815 = sbr.rel (%p813) target = $region64
        $region63: #{pallas_fwd.1} parent=59 // pred_region
          %s816 = sand.u32 %s142, 1
          %s817 = scalar_lea.sflag [#allocation4], %s816
          %s818 = sand.u32 %s142, 1
          %s819 = smul.addr %s818, 128
          %s820 = scalar_lea.vmem [#allocation8], %s819
          %821 = dma.done %s817, 2048
        $region64: #{pallas_fwd.1} parent=59 // pred_fallthru
          _
      $region60: #{pallas_fwd.1} parent=5 // pred_fallthru
        _
    $region6: #{pallas_fwd.1} parent=1 // loop_footer
      %s22 = sadd.s32 1, %s18
    $region7: #{pallas_fwd.1} parent=1 // loop_footer_branch
      %17 = sbr.rel target = $region3
    $region8: #{pallas_fwd.1} parent=1 // loop_exit
      _
    %822 = vsyncpa [#allocation3], 1
    %s823 = scalar_lea.sflag [#allocation3], 1
    %824 = vsyncpa %s823, 1
    %825 = vsyncpa [#allocation6], 1
    %826 = vsyncpa [#allocation4], 1
    %s827 = scalar_lea.sflag [#allocation4], 1
    %828 = vsyncpa %s827, 1

</llo_original>
